<compile_context>
chip_gen: v7x
topology: tpu7x:2x2x1
jax: 0.10.0
libtpu: 0.0.40
codegen_flags: <defaults>
</compile_context>

<pallas_src>
import jax
import jax.numpy as jnp
from jax.experimental import pallas as pl
from jax.experimental.pallas import tpu as pltpu


def _pos_emb_kernel(x_ref, mult_ref, add_ref, o_ref):
    # x block: (bb, tr, 128); PE blocks: (1, tr, 128) -> broadcast over batch.
    # Compute in the promoted dtype, cast only at the store.
    o_ref[...] = (x_ref[...] * mult_ref[...] + add_ref[...]).astype(o_ref.dtype)


def complex_learnable_pos_embedding(x, add_pe_table, mult_pe_table, *, row_tile=2048):
    """x: (B, L, D); *_pe_table: (max_len, D).  Returns x * mult_pe[:L] + add_pe[:L]."""
    B, L, D = x.shape
    out_dtype = x.dtype
    lanes = 128

    # Static "gather": position_ids == arange(L) -> first L rows of each table.
    add_pe = jax.lax.slice(add_pe_table, (0, 0), (L, D))
    mult_pe = jax.lax.slice(mult_pe_table, (0, 0), (L, D))

    # Lane-dense fold of (L, D) -> (R, 128), zero-padding the tail if needed so
    # stores stay unmasked full-width vst even when D < 128.
    flat = L * D
    pad = (-flat) % lanes
    flat_p = flat + pad
    R = flat_p // lanes

    x_f = x.reshape(B, flat)
    mult_f = mult_pe.reshape(1, flat)
    add_f = add_pe.reshape(1, flat)
    if pad:
        x_f = jnp.pad(x_f, ((0, 0), (0, pad)))
        mult_f = jnp.pad(mult_f, ((0, 0), (0, pad)))
        add_f = jnp.pad(add_f, ((0, 0), (0, pad)))

    x_r = x_f.reshape(B, R, lanes)
    mult_r = mult_f.reshape(1, R, lanes)
    add_r = add_f.reshape(1, R, lanes)

    # Row tile: full extent if it fits, else row_tile (multiple of 8 -> (8,128) ok).
    tr = R if R <= row_tile else row_tile
    grid_r = pl.cdiv(R, tr)

    # Tiny-problem path: whole batch in one block -> a single grid step.
    small = grid_r == 1 and B * R * lanes * x_r.dtype.itemsize <= (2 << 20)
    bb = B if small else 1
    grid_b = pl.cdiv(B, bb)

    out = pl.pallas_call(
        _pos_emb_kernel,
        out_shape=jax.ShapeDtypeStruct((B, R, lanes), out_dtype),
        grid=(grid_r, grid_b),
        in_specs=[
            pl.BlockSpec((bb, tr, lanes), lambda r, b: (b, r, 0)),   # x
            pl.BlockSpec((1, tr, lanes), lambda r, b: (0, r, 0)),    # mult_pe (batch-shared)
            pl.BlockSpec((1, tr, lanes), lambda r, b: (0, r, 0)),    # add_pe  (batch-shared)
        ],
        out_specs=pl.BlockSpec((bb, tr, lanes), lambda r, b: (b, r, 0)),
        compiler_params=pltpu.CompilerParams(
            dimension_semantics=("parallel", "arbitrary"),
        ),
    )(x_r, mult_r, add_r)

    out = out.reshape(B, flat_p)
    if pad:
        out = out[:, :flat]
    return out.reshape(B, L, D)


if __name__ == "__main__":
    # Small, deterministic setup consistent with the module:
    #   d_model = 32, max_len = 200, batch = 2, seq_len = 8
    d_model, max_len = 32, 200
    B, L = 2, 8

    key = jax.random.PRNGKey(0)
    k_x, k_add, k_mult = jax.random.split(key, 3)

    x = jax.random.normal(k_x, (B, L, d_model), dtype=jnp.float32)
    # nn.Embedding default init is N(0, 1)
    add_pe_table = jax.random.normal(k_add, (max_len, d_model), dtype=jnp.float32)
    mult_pe_table = jax.random.normal(k_mult, (max_len, d_model), dtype=jnp.float32)

    out = complex_learnable_pos_embedding(x, add_pe_table, mult_pe_table)
    out = jax.block_until_ready(out)

    # Reference check (plain JAX) of the forward semantics.
    ref = x * mult_pe_table[None, :L, :] + add_pe_table[None, :L, :]
    assert out.shape == (B, L, d_model)
    assert jnp.allclose(out, ref, atol=1e-6), "mismatch vs reference"

    print("KERNEL_OK")
</pallas_src>

<mosaic_0001>
module attributes {stable_mosaic.version = 11 : i64} {
  func.func @_pos_emb_kernel(%arg0: i32, %arg1: i32, %arg2: memref<2x2x128xf32, #tpu.memory_space<vmem>>, %arg3: memref<1x2x128xf32, #tpu.memory_space<vmem>>, %arg4: memref<1x2x128xf32, #tpu.memory_space<vmem>>, %arg5: memref<2x2x128xf32, #tpu.memory_space<vmem>>) attributes {dimension_semantics = [#tpu.dimension_semantics<parallel>, #tpu.dimension_semantics<arbitrary>], iteration_bounds = array<i64: 1, 1>, scalar_prefetch = 0 : i64, scratch_operands = 0 : i64, tpu.core_type = #tpu.core_type<tc>, window_params = [{transform_indices = @transform_0, window_bounds = array<i64: 2, 2, 128>}, {transform_indices = @transform_1, window_bounds = array<i64: 1, 2, 128>}, {transform_indices = @transform_2, window_bounds = array<i64: 1, 2, 128>}, {transform_indices = @transform_3, window_bounds = array<i64: 2, 2, 128>}]} {
    %c0 = arith.constant 0 : index
    %c0_0 = arith.constant 0 : index
    %c0_1 = arith.constant 0 : index
    %0 = vector.load %arg2[%c0, %c0_0, %c0_1] : memref<2x2x128xf32, #tpu.memory_space<vmem>>, vector<2x2x128xf32>
    %c0_2 = arith.constant 0 : index
    %c0_3 = arith.constant 0 : index
    %c0_4 = arith.constant 0 : index
    %1 = vector.load %arg3[%c0_2, %c0_3, %c0_4] : memref<1x2x128xf32, #tpu.memory_space<vmem>>, vector<1x2x128xf32>
    %2 = vector.broadcast %1 : vector<1x2x128xf32> to vector<2x2x128xf32>
    %3 = arith.mulf %0, %2 : vector<2x2x128xf32>
    %c0_5 = arith.constant 0 : index
    %c0_6 = arith.constant 0 : index
    %c0_7 = arith.constant 0 : index
    %4 = vector.load %arg4[%c0_5, %c0_6, %c0_7] : memref<1x2x128xf32, #tpu.memory_space<vmem>>, vector<1x2x128xf32>
    %5 = vector.broadcast %4 : vector<1x2x128xf32> to vector<2x2x128xf32>
    %6 = arith.addf %3, %5 : vector<2x2x128xf32>
    %c0_8 = arith.constant 0 : index
    %c0_9 = arith.constant 0 : index
    %c0_10 = arith.constant 0 : index
    %7 = vector.load %arg5[%c0_8, %c0_9, %c0_10] : memref<2x2x128xf32, #tpu.memory_space<vmem>>, vector<2x2x128xf32>
    tpu.vector_store %arg5[%c0_8, %c0_9, %c0_10], %6 {strides = array<i32>} : memref<2x2x128xf32, #tpu.memory_space<vmem>>, vector<2x2x128xf32>,
    return
  }
  func.func @transform_0(%arg0: i32, %arg1: i32) -> (i32, i32, i32) {
    %c0_i32 = arith.constant 0 : i32
    %c0_i32_0 = arith.constant 0 : i32
    return %arg1, %arg0, %c0_i32 : i32, i32, i32
  }
  func.func @transform_1(%arg0: i32, %arg1: i32) -> (i32, i32, i32) {
    %c0_i32 = arith.constant 0 : i32
    %c0_i32_0 = arith.constant 0 : i32
    %c0_i32_1 = arith.constant 0 : i32
    return %c0_i32, %arg0, %c0_i32_0 : i32, i32, i32
  }
  func.func @transform_2(%arg0: i32, %arg1: i32) -> (i32, i32, i32) {
    %c0_i32 = arith.constant 0 : i32
    %c0_i32_0 = arith.constant 0 : i32
    %c0_i32_1 = arith.constant 0 : i32
    return %c0_i32, %arg0, %c0_i32_0 : i32, i32, i32
  }
  func.func @transform_3(%arg0: i32, %arg1: i32) -> (i32, i32, i32) {
    %c0_i32 = arith.constant 0 : i32
    %c0_i32_0 = arith.constant 0 : i32
    return %arg1, %arg0, %c0_i32 : i32, i32, i32
  }
}

</mosaic_0001>

<llo_original>
// kernel: tpu_custom_call.1
$region0: #{tpu_custom_call.1}
  #allocation0 [shape = 'u32[]', space=smem, size = 0x4, offset = 0x4, fixed_abs, tag = 'smem constant byte address 0x4 - core index']
  #allocation1 [shape = 'u32[144,128]{1,0:T(1,128)}', space=vmem, size = 0x12000, scoped, tag = 'internal scratch']
  %s0 = inlined_call_operand.hbm [shape: f32[2,2,128], index: 0, kind: input, shape index: {}]
  %s1 = inlined_call_operand.vmem [shape: f32[1,2,128], index: 1, kind: input, shape index: {}]
  %s2 = inlined_call_operand.vmem [shape: f32[1,2,128], index: 2, kind: input, shape index: {}]
  %s3 = inlined_call_operand.hbm [shape: f32[2,2,128], index: 3, kind: output, shape index: {}]
  %s4 = sld [smem:[#allocation0]]
  $region26: #{tpu_custom_call.1} parent=0
    _
  %s6 = ssub.s32 1, %s4
  %s7 = scalar_select 0, %s6, %s4
  $region1: #{tpu_custom_call.1} parent=0
    #allocation2 [shape = 'u8[2048]{0}', space=vmem, size = 0x800, scoped, tag = 'input window, operand 0, single buffered']
    #allocation3 [shape = 's32[1]{0}', space=sflag, size = 0x4, scoped, tag = 'scoped memory for tpu_custom_call.1']
    #allocation4 [shape = 's32[1]{0}', space=sflag, size = 0x4, scoped, tag = 'scoped memory for tpu_custom_call.1']
    #allocation5 [shape = 'u8[2048]{0}', space=vmem, size = 0x800, scoped, tag = 'output window, operand 0, single buffered']
    %8 = vsyncpa [#allocation3], 0
    %9 = vsyncpa [#allocation4], 0
    // Predicated region
    $region2: #{tpu_custom_call.1} parent=1 // pred_check
      _
    $region3: #{tpu_custom_call.1} parent=1 // pred_check_branch
      %11 = sbr.rel (0) target = $region5
    $region4: #{tpu_custom_call.1} parent=1 // pred_region
      %s13 = ssub.s32 64, 64
      %14 = vsyncadd [#allocation3], %s13
      %s15 = sshll.u32 [#allocation2], 4
      %s16 = int_to_ptr.vmem [resolvable:$true] %s15
      %21 = dma.hbm_to_vmem [thread:$0]  %s0, 64, %s16, [#allocation3], 32, 32, 2
    $region5: #{tpu_custom_call.1} parent=1 // pred_fallthru
      _
    // Predicated region
    $region6: #{tpu_custom_call.1} parent=1 // pred_check
      _
    $region7: #{tpu_custom_call.1} parent=1 // pred_check_branch
      %23 = sbr.rel (0) target = $region9
    $region8: #{tpu_custom_call.1} parent=1 // pred_region
      _
    $region9: #{tpu_custom_call.1} parent=1 // pred_fallthru
      _
    // Predicated region
    $region10: #{tpu_custom_call.1} parent=1 // pred_check
      _
    $region11: #{tpu_custom_call.1} parent=1 // pred_check_branch
      %25 = sbr.rel (0) target = $region13
    $region12: #{tpu_custom_call.1} parent=1 // pred_region
      _
    $region13: #{tpu_custom_call.1} parent=1 // pred_fallthru
      _
    // Predicated region
    $region14: #{tpu_custom_call.1} parent=1 // pred_check
      _
    $region15: #{tpu_custom_call.1} parent=1 // pred_check_branch
      %27 = sbr.rel (0) target = $region17
    $region16: #{tpu_custom_call.1} parent=1 // pred_region
      %28 = dma.done [#allocation3], 64
    $region17: #{tpu_custom_call.1} parent=1 // pred_fallthru
      _
    %v29 = vld [vmem:[#allocation2] sm:$0x3]
    %v30 = vld [vmem:[#allocation2 + $0x2] sm:$0x3]
    %v31 = vld [vmem:[%s1] sm:$0x3]
    %v32 = vmul.f32 %v29, %v31
    %v33 = vmul.f32 %v30, %v31
    %v34 = vld [vmem:[%s2] sm:$0x3]
    %v35 = vadd.f32 %v32, %v34
    %v36 = vadd.f32 %v33, %v34
    %37 = vst [vmem:[#allocation5] sm:$0x3] %v35
    %38 = vst [vmem:[#allocation5 + $0x2] sm:$0x3] %v36
    // Predicated region
    $region18: #{tpu_custom_call.1} parent=1 // pred_check
      _
    $region19: #{tpu_custom_call.1} parent=1 // pred_check_branch
      %40 = sbr.rel (0) target = $region21
    $region20: #{tpu_custom_call.1} parent=1 // pred_region
      %s42 = ssub.s32 64, 64
      %43 = vsyncadd [#allocation4], %s42
      %s44 = sshll.u32 [#allocation5], 4
      %s45 = int_to_ptr.vmem [resolvable:$true] %s44
      %50 = dma.vmem_to_hbm [thread:$0]  %s45, 64, %s3, [#allocation4], 32, 32, 2
    $region21: #{tpu_custom_call.1} parent=1 // pred_fallthru
      _
    // Predicated region
    $region22: #{tpu_custom_call.1} parent=1 // pred_check
      _
    $region23: #{tpu_custom_call.1} parent=1 // pred_check_branch
      %52 = sbr.rel (0) target = $region25
    $region24: #{tpu_custom_call.1} parent=1 // pred_region
      %53 = dma.done [#allocation4], 64
    $region25: #{tpu_custom_call.1} parent=1 // pred_fallthru
      _
    %54 = vsyncpa [#allocation3], 1
    %55 = vsyncpa [#allocation4], 1

</llo_original>
